<compile_context>
chip_gen: v5e
topology: v5e:2x2
jax: 0.10.0
libtpu: 0.0.40
codegen_flags: <defaults>
</compile_context>

<pallas_src>
import functools

import jax
import jax.numpy as jnp
import numpy as np
from jax.experimental import pallas as pl
from jax.experimental.pallas import tpu as pltpu


def _head_kernel(num_features, *refs):
    # refs layout:
    #   x_0..x_{F-1}  : (C, TP)   per-feature channel-major pixel tiles
    #   w1_0..w1_{F-1}: (C, C)    per-feature slice of the fuse 1x1 conv weight
    #   w2_ref        : (NC, C)   predict 1x1 conv weight with BN scale folded in
    #   b2_ref        : (NC, 1)   predict bias with BN shift folded in
    #   o_ref         : (NC, TP)  output tile (pixels on lanes -> dense stores)
    x_refs = refs[:num_features]
    w1_refs = refs[num_features:2 * num_features]
    w2_ref = refs[2 * num_features]
    b2_ref = refs[2 * num_features + 1]
    o_ref = refs[2 * num_features + 2]

    # Fused 1x1 conv over the (virtually) concatenated channel axis as a sum of
    # per-feature matmuls -- the concat never materializes in HBM or VMEM.
    h = jnp.dot(w1_refs[0][...], x_refs[0][...],
                preferred_element_type=jnp.float32)
    for f in range(1, num_features):
        h = h + jnp.dot(w1_refs[f][...], x_refs[f][...],
                        preferred_element_type=jnp.float32)
    h = jnp.maximum(h, 0.0)  # ReLU

    # Eval-mode BatchNorm is already folded into w2/b2 by the wrapper.
    o = jnp.dot(w2_ref[...], h, preferred_element_type=jnp.float32) + b2_ref[...]
    o_ref[...] = o.astype(o_ref.dtype)


def _pick_pixel_tile(P, C, NC, num_features, itemsize,
                     vmem_budget_bytes=16 * 1024 * 1024, max_tp=32768):
    """Largest lane-tile (multiple of 128) whose double-buffered working set
    fits comfortably inside the default scoped-VMEM budget."""
    # Bytes of VMEM consumed per pixel column: F input rows + NC output rows,
    # each double-buffered by the Pallas pipeline.
    per_px = 2 * itemsize * (num_features * C + NC)
    tp = vmem_budget_bytes // max(per_px, 1)
    tp = max(128, min(tp, max_tp))
    tp = (tp // 128) * 128
    if P <= tp:
        return P  # full spatial extent: always a legal block shape
    return tp


def segformer_head_pallas(xs, w1_blocks, w2p, b2p):
    """xs: list of F channel-major features, each (N, C, P). Returns (N, NC, P)."""
    num_features = len(xs)
    N, C, P = xs[0].shape
    NC = w2p.shape[0]
    itemsize = jnp.dtype(xs[0].dtype).itemsize

    tp = _pick_pixel_tile(P, C, NC, num_features, itemsize)
    n_ptiles = pl.cdiv(P, tp)
    grid = (N, n_ptiles)

    x_spec = pl.BlockSpec((None, C, tp), lambda n, p: (n, 0, p))
    w1_spec = pl.BlockSpec((C, C), lambda n, p: (0, 0))
    w2_spec = pl.BlockSpec((NC, C), lambda n, p: (0, 0))
    b2_spec = pl.BlockSpec((NC, 1), lambda n, p: (0, 0))
    out_spec = pl.BlockSpec((None, NC, tp), lambda n, p: (n, 0, p))

    flops = 2 * N * P * (num_features * C * C + NC * C)
    bytes_accessed = itemsize * (N * P * num_features * C + N * P * NC
                                 + num_features * C * C + NC * C + NC)

    kernel = functools.partial(_head_kernel, num_features)
    out = pl.pallas_call(
        kernel,
        out_shape=jax.ShapeDtypeStruct((N, NC, P), xs[0].dtype),
        grid_spec=pltpu.PrefetchScalarGridSpec(
            num_scalar_prefetch=0,
            grid=grid,
            in_specs=[x_spec] * num_features
                     + [w1_spec] * num_features
                     + [w2_spec, b2_spec],
            out_specs=out_spec,
        ),
        compiler_params=pltpu.CompilerParams(
            dimension_semantics=("parallel", "parallel")),
        cost_estimate=pl.CostEstimate(flops=flops, transcendentals=0,
                                      bytes_accessed=bytes_accessed),
    )(*xs, *w1_blocks, w2p, b2p)
    return out


def segformer_segmentation_head(features, params, *, eps=1e-5):
    """features: list of F NCHW arrays, each (N, C, H, W). Returns (N, NC, H, W)."""
    num_features = len(features)
    N, C, H, W = features[0].shape
    P = H * W

    # NCHW -> (N, C, H*W): pure reshape, no data movement, no transpose.
    xs = [jnp.reshape(f, (N, C, P)) for f in features]

    w1 = params["fuse_w"][:, :, 0, 0]        # (C, C*F) -- native layout, no transpose
    gamma = params["bn_gamma"]
    beta = params["bn_beta"]
    mean = params["bn_mean"]
    var = params["bn_var"]
    w2 = params["pred_w"][:, :, 0, 0]        # (NC, C)
    b2 = params["pred_b"]                    # (NC,)
    NC = w2.shape[0]

    inv_std = 1.0 / jnp.sqrt(var + eps)
    scale = gamma * inv_std                  # (C,)
    shift = beta - mean * scale              # (C,)

    # Fold eval-mode BN (applied after ReLU) into the predict conv -- exact:
    #   w2 @ (scale*h + shift) + b2 == (w2*scale) @ h + (w2 @ shift + b2)
    w2p = (w2 * scale[None, :]).astype(jnp.float32)              # (NC, C)
    b2p = (w2 @ shift + b2).reshape(NC, 1).astype(jnp.float32)   # (NC, 1)

    # Per-feature column slices of the fuse weight (tiny arrays, VMEM-resident).
    w1_blocks = [w1[:, f * C:(f + 1) * C].astype(jnp.float32)
                 for f in range(num_features)]

    out = segformer_head_pallas(xs, w1_blocks, w2p, b2p)
    return out.reshape(N, NC, H, W)          # already channel-major NCHW


def _reference(features, params, eps=1e-5):
    """Pure-JAX reference (same eval-mode BN semantics, no folding)."""
    x = jnp.concatenate(features, axis=1)
    w1 = params["fuse_w"][:, :, 0, 0]
    h = jnp.einsum("ncHW,oc->noHW", x, w1)
    h = jnp.maximum(h, 0.0)
    scale = params["bn_gamma"] / jnp.sqrt(params["bn_var"] + eps)
    shift = params["bn_beta"] - params["bn_mean"] * scale
    h = h * scale[None, :, None, None] + shift[None, :, None, None]
    w2 = params["pred_w"][:, :, 0, 0]
    out = jnp.einsum("ncHW,oc->noHW", h, w2) + params["pred_b"][None, :, None, None]
    return out


if __name__ == "__main__":
    # Small shapes consistent with the module: channels=8, num_features=4,
    # num_classes=5, batch=2, spatial=16x16.
    channels = 8
    num_features = 4
    num_classes = 5
    N, H, W = 2, 16, 16

    key = jax.random.PRNGKey(0)
    keys = jax.random.split(key, 8 + num_features)

    params = {
        "fuse_w": 0.1 * jax.random.normal(
            keys[0], (channels, channels * num_features, 1, 1), jnp.float32),
        "bn_gamma": 1.0 + 0.1 * jax.random.normal(keys[1], (channels,), jnp.float32),
        "bn_beta": 0.1 * jax.random.normal(keys[2], (channels,), jnp.float32),
        "bn_mean": 0.05 * jax.random.normal(keys[3], (channels,), jnp.float32),
        "bn_var": jnp.abs(1.0 + 0.1 * jax.random.normal(keys[4], (channels,), jnp.float32)),
        "pred_w": 0.1 * jax.random.normal(
            keys[5], (num_classes, channels, 1, 1), jnp.float32),
        "pred_b": 0.1 * jax.random.normal(keys[6], (num_classes,), jnp.float32),
    }

    features = [
        jax.random.normal(keys[8 + i], (N, channels, H, W), jnp.float32)
        for i in range(num_features)
    ]

    out = segformer_segmentation_head(features, params)
    out = jax.block_until_ready(out)

    ref = jax.block_until_ready(_reference(features, params))
    assert out.shape == (N, num_classes, H, W), out.shape
    np.testing.assert_allclose(np.asarray(out), np.asarray(ref), rtol=1e-5, atol=1e-5)

    print("KERNEL_OK")
</pallas_src>

<mosaic_0001>
module attributes {stable_mosaic.version = 11 : i64} {
  func.func @_head_kernel(%arg0: i32, %arg1: i32, %arg2: memref<1x8x256xf32, #tpu.memory_space<vmem>>, %arg3: memref<1x8x256xf32, #tpu.memory_space<vmem>>, %arg4: memref<1x8x256xf32, #tpu.memory_space<vmem>>, %arg5: memref<1x8x256xf32, #tpu.memory_space<vmem>>, %arg6: memref<8x8xf32, #tpu.memory_space<vmem>>, %arg7: memref<8x8xf32, #tpu.memory_space<vmem>>, %arg8: memref<8x8xf32, #tpu.memory_space<vmem>>, %arg9: memref<8x8xf32, #tpu.memory_space<vmem>>, %arg10: memref<5x8xf32, #tpu.memory_space<vmem>>, %arg11: memref<5x1xf32, #tpu.memory_space<vmem>>, %arg12: memref<1x5x256xf32, #tpu.memory_space<vmem>>) attributes {dimension_semantics = [#tpu.dimension_semantics<parallel>, #tpu.dimension_semantics<parallel>], iteration_bounds = array<i64: 2, 1>, scalar_prefetch = 0 : i64, scratch_operands = 0 : i64, tpu.core_type = #tpu.core_type<tc>, window_params = [{transform_indices = @transform_0, window_bounds = array<i64: 1, 8, 256>}, {transform_indices = @transform_1, window_bounds = array<i64: 1, 8, 256>}, {transform_indices = @transform_2, window_bounds = array<i64: 1, 8, 256>}, {transform_indices = @transform_3, window_bounds = array<i64: 1, 8, 256>}, {pipeline_mode = #tpu.pipeline_mode<synchronous>, transform_indices = @transform_4, window_bounds = array<i64: 8, 8>}, {pipeline_mode = #tpu.pipeline_mode<synchronous>, transform_indices = @transform_5, window_bounds = array<i64: 8, 8>}, {pipeline_mode = #tpu.pipeline_mode<synchronous>, transform_indices = @transform_6, window_bounds = array<i64: 8, 8>}, {pipeline_mode = #tpu.pipeline_mode<synchronous>, transform_indices = @transform_7, window_bounds = array<i64: 8, 8>}, {pipeline_mode = #tpu.pipeline_mode<synchronous>, transform_indices = @transform_8, window_bounds = array<i64: 5, 8>}, {pipeline_mode = #tpu.pipeline_mode<synchronous>, transform_indices = @transform_9, window_bounds = array<i64: 5, 1>}, {transform_indices = @transform_10, window_bounds = array<i64: 1, 5, 256>}]} {
    %c0 = arith.constant 0 : index
    %c0_0 = arith.constant 0 : index
    %0 = vector.load %arg6[%c0, %c0_0] : memref<8x8xf32, #tpu.memory_space<vmem>>, vector<8x8xf32>
    %c0_1 = arith.constant 0 : index
    %c0_2 = arith.constant 0 : index
    %c0_3 = arith.constant 0 : index
    %1 = vector.load %arg2[%c0_1, %c0_2, %c0_3] : memref<1x8x256xf32, #tpu.memory_space<vmem>>, vector<1x8x256xf32>
    %2 = vector.shape_cast %1 : vector<1x8x256xf32> to vector<8x256xf32>
    %cst = arith.constant dense<0.000000e+00> : vector<8x256xf32>
    %3 = tpu.matmul %0, %2, %cst {dimension_numbers = #tpu.dot_dimension_numbers<[1], [0], [0], [1], [0, 0, 1, 1], [], []>} : vector<8x8xf32>, vector<8x256xf32>, vector<8x256xf32> -> vector<8x256xf32>
    %c0_4 = arith.constant 0 : index
    %c0_5 = arith.constant 0 : index
    %4 = vector.load %arg7[%c0_4, %c0_5] : memref<8x8xf32, #tpu.memory_space<vmem>>, vector<8x8xf32>
    %c0_6 = arith.constant 0 : index
    %c0_7 = arith.constant 0 : index
    %c0_8 = arith.constant 0 : index
    %5 = vector.load %arg3[%c0_6, %c0_7, %c0_8] : memref<1x8x256xf32, #tpu.memory_space<vmem>>, vector<1x8x256xf32>
    %6 = vector.shape_cast %5 : vector<1x8x256xf32> to vector<8x256xf32>
    %cst_9 = arith.constant dense<0.000000e+00> : vector<8x256xf32>
    %7 = tpu.matmul %4, %6, %cst_9 {dimension_numbers = #tpu.dot_dimension_numbers<[1], [0], [0], [1], [0, 0, 1, 1], [], []>} : vector<8x8xf32>, vector<8x256xf32>, vector<8x256xf32> -> vector<8x256xf32>
    %8 = arith.addf %3, %7 : vector<8x256xf32>
    %c0_10 = arith.constant 0 : index
    %c0_11 = arith.constant 0 : index
    %9 = vector.load %arg8[%c0_10, %c0_11] : memref<8x8xf32, #tpu.memory_space<vmem>>, vector<8x8xf32>
    %c0_12 = arith.constant 0 : index
    %c0_13 = arith.constant 0 : index
    %c0_14 = arith.constant 0 : index
    %10 = vector.load %arg4[%c0_12, %c0_13, %c0_14] : memref<1x8x256xf32, #tpu.memory_space<vmem>>, vector<1x8x256xf32>
    %11 = vector.shape_cast %10 : vector<1x8x256xf32> to vector<8x256xf32>
    %cst_15 = arith.constant dense<0.000000e+00> : vector<8x256xf32>
    %12 = tpu.matmul %9, %11, %cst_15 {dimension_numbers = #tpu.dot_dimension_numbers<[1], [0], [0], [1], [0, 0, 1, 1], [], []>} : vector<8x8xf32>, vector<8x256xf32>, vector<8x256xf32> -> vector<8x256xf32>
    %13 = arith.addf %8, %12 : vector<8x256xf32>
    %c0_16 = arith.constant 0 : index
    %c0_17 = arith.constant 0 : index
    %14 = vector.load %arg9[%c0_16, %c0_17] : memref<8x8xf32, #tpu.memory_space<vmem>>, vector<8x8xf32>
    %c0_18 = arith.constant 0 : index
    %c0_19 = arith.constant 0 : index
    %c0_20 = arith.constant 0 : index
    %15 = vector.load %arg5[%c0_18, %c0_19, %c0_20] : memref<1x8x256xf32, #tpu.memory_space<vmem>>, vector<1x8x256xf32>
    %16 = vector.shape_cast %15 : vector<1x8x256xf32> to vector<8x256xf32>
    %cst_21 = arith.constant dense<0.000000e+00> : vector<8x256xf32>
    %17 = tpu.matmul %14, %16, %cst_21 {dimension_numbers = #tpu.dot_dimension_numbers<[1], [0], [0], [1], [0, 0, 1, 1], [], []>} : vector<8x8xf32>, vector<8x256xf32>, vector<8x256xf32> -> vector<8x256xf32>
    %18 = arith.addf %13, %17 : vector<8x256xf32>
    %cst_22 = arith.constant 0.000000e+00 : f32
    %19 = vector.broadcast %cst_22 : f32 to vector<8x256xf32>
    %20 = arith.maximumf %18, %19 : vector<8x256xf32>
    %c0_23 = arith.constant 0 : index
    %c0_24 = arith.constant 0 : index
    %21 = vector.load %arg10[%c0_23, %c0_24] : memref<5x8xf32, #tpu.memory_space<vmem>>, vector<5x8xf32>
    %cst_25 = arith.constant dense<0.000000e+00> : vector<5x256xf32>
    %22 = tpu.matmul %21, %20, %cst_25 {dimension_numbers = #tpu.dot_dimension_numbers<[1], [0], [0], [1], [0, 0, 1, 1], [], []>} : vector<5x8xf32>, vector<8x256xf32>, vector<5x256xf32> -> vector<5x256xf32>
    %c0_26 = arith.constant 0 : index
    %c0_27 = arith.constant 0 : index
    %23 = vector.load %arg11[%c0_26, %c0_27] : memref<5x1xf32, #tpu.memory_space<vmem>>, vector<5x1xf32>
    %24 = vector.broadcast %23 : vector<5x1xf32> to vector<5x256xf32>
    %25 = arith.addf %22, %24 : vector<5x256xf32>
    %c0_28 = arith.constant 0 : index
    %c0_29 = arith.constant 0 : index
    %c0_30 = arith.constant 0 : index
    %26 = vector.load %arg12[%c0_28, %c0_29, %c0_30] : memref<1x5x256xf32, #tpu.memory_space<vmem>>, vector<1x5x256xf32>
    %27 = vector.shape_cast %26 : vector<1x5x256xf32> to vector<5x256xf32>
    %28 = vector.shape_cast %25 : vector<5x256xf32> to vector<1x5x256xf32>
    tpu.vector_store %arg12[%c0_28, %c0_29, %c0_30], %28 {strides = array<i32>} : memref<1x5x256xf32, #tpu.memory_space<vmem>>, vector<1x5x256xf32>,
    return
  }
  func.func @transform_0(%arg0: i32, %arg1: i32) -> (i32, i32, i32) {
    %c0_i32 = arith.constant 0 : i32
    %c0_i32_0 = arith.constant 0 : i32
    return %arg0, %c0_i32, %arg1 : i32, i32, i32
  }
  func.func @transform_1(%arg0: i32, %arg1: i32) -> (i32, i32, i32) {
    %c0_i32 = arith.constant 0 : i32
    %c0_i32_0 = arith.constant 0 : i32
    return %arg0, %c0_i32, %arg1 : i32, i32, i32
  }
  func.func @transform_2(%arg0: i32, %arg1: i32) -> (i32, i32, i32) {
    %c0_i32 = arith.constant 0 : i32
    %c0_i32_0 = arith.constant 0 : i32
    return %arg0, %c0_i32, %arg1 : i32, i32, i32
  }
  func.func @transform_3(%arg0: i32, %arg1: i32) -> (i32, i32, i32) {
    %c0_i32 = arith.constant 0 : i32
    %c0_i32_0 = arith.constant 0 : i32
    return %arg0, %c0_i32, %arg1 : i32, i32, i32
  }
  func.func @transform_4(%arg0: i32, %arg1: i32) -> (i32, i32) {
    %c0_i32 = arith.constant 0 : i32
    %c0_i32_0 = arith.constant 0 : i32
    %c0_i32_1 = arith.constant 0 : i32
    return %c0_i32, %c0_i32_0 : i32, i32
  }
  func.func @transform_5(%arg0: i32, %arg1: i32) -> (i32, i32) {
    %c0_i32 = arith.constant 0 : i32
    %c0_i32_0 = arith.constant 0 : i32
    %c0_i32_1 = arith.constant 0 : i32
    return %c0_i32, %c0_i32_0 : i32, i32
  }
  func.func @transform_6(%arg0: i32, %arg1: i32) -> (i32, i32) {
    %c0_i32 = arith.constant 0 : i32
    %c0_i32_0 = arith.constant 0 : i32
    %c0_i32_1 = arith.constant 0 : i32
    return %c0_i32, %c0_i32_0 : i32, i32
  }
  func.func @transform_7(%arg0: i32, %arg1: i32) -> (i32, i32) {
    %c0_i32 = arith.constant 0 : i32
    %c0_i32_0 = arith.constant 0 : i32
    %c0_i32_1 = arith.constant 0 : i32
    return %c0_i32, %c0_i32_0 : i32, i32
  }
  func.func @transform_8(%arg0: i32, %arg1: i32) -> (i32, i32) {
    %c0_i32 = arith.constant 0 : i32
    %c0_i32_0 = arith.constant 0 : i32
    %c0_i32_1 = arith.constant 0 : i32
    return %c0_i32, %c0_i32_0 : i32, i32
  }
  func.func @transform_9(%arg0: i32, %arg1: i32) -> (i32, i32) {
    %c0_i32 = arith.constant 0 : i32
    %c0_i32_0 = arith.constant 0 : i32
    %c0_i32_1 = arith.constant 0 : i32
    return %c0_i32, %c0_i32_0 : i32, i32
  }
  func.func @transform_10(%arg0: i32, %arg1: i32) -> (i32, i32, i32) {
    %c0_i32 = arith.constant 0 : i32
    %c0_i32_0 = arith.constant 0 : i32
    return %arg0, %c0_i32, %arg1 : i32, i32, i32
  }
}

</mosaic_0001>

<llo_original>
// kernel: tpu_custom_call.1
$region0: #{tpu_custom_call.1}
  #allocation0 [shape = 'u32[]', space=smem, size = 0x4, offset = 0x4, fixed_abs, tag = 'smem constant byte address 0x4 - core index']
  #allocation1 [shape = 'u32[72,128]{1,0:T(1,128)}', space=vmem, size = 0x9000, scoped, tag = 'internal scratch']
  %s0 = inlined_call_operand.hbm [shape: f32[2,8,256], index: 0, kind: input, shape index: {}]
  %s1 = inlined_call_operand.hbm [shape: f32[2,8,256], index: 1, kind: input, shape index: {}]
  %s2 = inlined_call_operand.hbm [shape: f32[2,8,256], index: 2, kind: input, shape index: {}]
  %s3 = inlined_call_operand.hbm [shape: f32[2,8,256], index: 3, kind: input, shape index: {}]
  %s4 = inlined_call_operand.vmem [shape: f32[8,8], index: 4, kind: input, shape index: {}]
  %s5 = inlined_call_operand.hbm [shape: f32[8,8], index: 5, kind: input, shape index: {}]
  %s6 = inlined_call_operand.hbm [shape: f32[8,8], index: 6, kind: input, shape index: {}]
  %s7 = inlined_call_operand.hbm [shape: f32[8,8], index: 7, kind: input, shape index: {}]
  %s8 = inlined_call_operand.vmem [shape: f32[5,8], index: 8, kind: input, shape index: {}]
  %s9 = inlined_call_operand.vmem [shape: f32[5,1], index: 9, kind: input, shape index: {}]
  %s10 = inlined_call_operand.vmem [shape: f32[2,5,256], index: 10, kind: output, shape index: {}]
  %s11 = sld [smem:[#allocation0]]
  $region101: #{tpu_custom_call.1} parent=0
    _
  %s13 = ssub.s32 1, %s11
  %s14 = scalar_select 0, %s13, %s11
  $region1: #{tpu_custom_call.1} parent=0
    #allocation2 [shape = 'u8[16384]{0}', space=vmem, size = 0x4000, scoped, tag = 'input window, operand 0']
    #allocation3 [shape = 's32[2]{0}', space=sflag, size = 0x8, scoped, tag = 'scoped memory for tpu_custom_call.1']
    #allocation4 [shape = 'u8[16384]{0}', space=vmem, size = 0x4000, scoped, tag = 'input window, operand 1']
    #allocation5 [shape = 's32[2]{0}', space=sflag, size = 0x8, scoped, tag = 'scoped memory for tpu_custom_call.1']
    #allocation6 [shape = 'u8[16384]{0}', space=vmem, size = 0x4000, scoped, tag = 'input window, operand 2']
    #allocation7 [shape = 'u8[16384]{0}', space=vmem, size = 0x4000, scoped, tag = 'input window, operand 3']
    #allocation8 [shape = 's32[2]{0}', space=sflag, size = 0x8, scoped, tag = 'scoped memory for tpu_custom_call.1']
    #allocation9 [shape = 'u8[4096]{0}', space=vmem, size = 0x1000, scoped, tag = 'input window, operand 5, single buffered']
    #allocation10 [shape = 'u8[4096]{0}', space=vmem, size = 0x1000, scoped, tag = 'input window, operand 6, single buffered']
    #allocation11 [shape = 's32[1]{0}', space=sflag, size = 0x4, scoped, tag = 'scoped memory for tpu_custom_call.1']
    #allocation12 [shape = 'u8[4096]{0}', space=vmem, size = 0x1000, scoped, tag = 'input window, operand 7, single buffered']
    %15 = vsyncpa [#allocation3], 0
    %s16 = scalar_lea.sflag [#allocation3], 1
    %17 = vsyncpa %s16, 0
    %18 = vsyncpa [#allocation5], 0
    %s19 = scalar_lea.sflag [#allocation5], 1
    %20 = vsyncpa %s19, 0
    %21 = vsyncpa [#allocation8], 0
    %s22 = scalar_lea.sflag [#allocation8], 1
    %23 = vsyncpa %s22, 0
    %24 = vsyncpa [#allocation11], 0
    loop: start=0, step=1, limit=4
    $region2: #{tpu_custom_call.1} parent=1 // loop_pre_header
      _
    $region3: #{tpu_custom_call.1} parent=1 // loop_header
      %s26 = sphi 0, %s30
      %p27 = scmp.ge.s32.totalorder %s26, 4
      %s33 = sphi 0, %s45
      %s34 = sphi 0, %s41
      %s35 = sphi 0, %s33
      %s36 = sphi 0, %s34
      %s37 = sphi 0, %s35
      %s38 = sphi 0, %s36
      %s50 = sphi 0, %s52
      %s53 = sphi 0, %s50
      %s54 = sphi 0, %s53
      %s70 = sphi 0, %s54
      %s78 = sphi 0, %s80
      %s81 = sphi 0, %s78
      %s82 = sphi 0, %s81
      %s98 = sphi 0, %s82
      %s106 = sphi 0, %s108
      %s109 = sphi 0, %s106
      %s110 = sphi 0, %s109
      %s126 = sphi 0, %s110
      %s134 = sphi 0, %s136
      %s137 = sphi 0, %s134
      %s138 = sphi 0, %s137
      %s154 = sphi 0, %s138
      %s158 = sphi 0, %s158
      %s160 = sphi 0, %s158
      %s161 = sphi 0, %s160
      %s175 = sphi 0, %s161
      %s179 = sphi 0, %s179
      %s181 = sphi 0, %s179
      %s182 = sphi 0, %s181
      %s196 = sphi 0, %s182
      %s200 = sphi 0, %s200
      %s202 = sphi 0, %s200
      %s203 = sphi 0, %s202
      %s217 = sphi 0, %s203
      %s221 = sphi 0, %s221
      %s223 = sphi 0, %s221
      %s224 = sphi 0, %s223
      %s238 = sphi 0, %s224
      %s242 = sphi 0, %s242
      %s244 = sphi 0, %s242
      %s245 = sphi 0, %s244
      %s259 = sphi 0, %s245
      %s263 = sphi 0, %s263
      %s265 = sphi 0, %s263
      %s266 = sphi 0, %s265
      %s280 = sphi 0, %s266
      %s288 = sphi 0, %s290
      %s291 = sphi 0, %s288
      %s292 = sphi 0, %s291
      %s308 = sphi 0, %s292
    $region4: #{tpu_custom_call.1} parent=1 // loop_header_branch
      %29 = sbr.rel (%p27) target = $region8
    $region5: #{tpu_custom_call.1} parent=1 // loop_body
      %s31 = ssub.s32 %s26, 1
      %s32 = ssub.s32 %s26, 2
      %s39 = sadd.s32 1, %s34
      %p40 = scmp.ge.s32.totalorder %s39, 1
      %s41 = scalar_select %p40, 0, %s39
      %s42 = sadd.s32 1, %s33
      %s43 = scalar_select %p40, %s42, %s33
      %p44 = scmp.ge.s32.totalorder %s43, 2
      %s45 = scalar_select %p44, 0, %s43
      %s46 = ssub.s32 %s33, %s45
      %s47 = ssub.s32 %s34, %s41
      %s48 = sor.u32 %s46, %s47
      %p49 = scmp.eq.s32.totalorder %s48, 0
      %s51 = sadd.s32 %s50, 1
      %s52 = scalar_select %p49, %s50, %s51
      %p55 = pneg %p49
      %p56 = scmp.eq.s32.totalorder %s26, 1
      %p57 = por %p55, %p56
      %p58 = scmp.ne.s32.totalorder %s50, %s53
      %p59 = scmp.eq.s32.totalorder %s26, 0
      %p60 = por %p58, %p59
      %p61 = scmp.ne.s32.totalorder %s50, %s53
      %p62 = scmp.eq.s32.totalorder %s31, 1
      %p63 = por %p61, %p62
      %p64 = scmp.ne.s32.totalorder %s53, %s54
      %p65 = scmp.eq.s32.totalorder %s31, 0
      %p66 = por %p64, %p65
      %p67 = scmp.ne.s32.totalorder %s53, %s54
      %p68 = scmp.eq.s32.totalorder %s32, 1
      %p69 = por %p67, %p68
      %p71 = scmp.ne.s32.totalorder %s54, %s70
      %p72 = scmp.eq.s32.totalorder %s32, 0
      %p73 = por %p71, %p72
      %s74 = ssub.s32 %s33, %s45
      %s75 = ssub.s32 %s34, %s41
      %s76 = sor.u32 %s74, %s75
      %p77 = scmp.eq.s32.totalorder %s76, 0
      %s79 = sadd.s32 %s78, 1
      %s80 = scalar_select %p77, %s78, %s79
      %p83 = pneg %p77
      %p84 = scmp.eq.s32.totalorder %s26, 1
      %p85 = por %p83, %p84
      %p86 = scmp.ne.s32.totalorder %s78, %s81
      %p87 = scmp.eq.s32.totalorder %s26, 0
      %p88 = por %p86, %p87
      %p89 = scmp.ne.s32.totalorder %s78, %s81
      %p90 = scmp.eq.s32.totalorder %s31, 1
      %p91 = por %p89, %p90
      %p92 = scmp.ne.s32.totalorder %s81, %s82
      %p93 = scmp.eq.s32.totalorder %s31, 0
      %p94 = por %p92, %p93
      %p95 = scmp.ne.s32.totalorder %s81, %s82
      %p96 = scmp.eq.s32.totalorder %s32, 1
      %p97 = por %p95, %p96
      %p99 = scmp.ne.s32.totalorder %s82, %s98
      %p100 = scmp.eq.s32.totalorder %s32, 0
      %p101 = por %p99, %p100
      %s102 = ssub.s32 %s33, %s45
      %s103 = ssub.s32 %s34, %s41
      %s104 = sor.u32 %s102, %s103
      %p105 = scmp.eq.s32.totalorder %s104, 0
      %s107 = sadd.s32 %s106, 1
      %s108 = scalar_select %p105, %s106, %s107
      %p111 = pneg %p105
      %p112 = scmp.eq.s32.totalorder %s26, 1
      %p113 = por %p111, %p112
      %p114 = scmp.ne.s32.totalorder %s106, %s109
      %p115 = scmp.eq.s32.totalorder %s26, 0
      %p116 = por %p114, %p115
      %p117 = scmp.ne.s32.totalorder %s106, %s109
      %p118 = scmp.eq.s32.totalorder %s31, 1
      %p119 = por %p117, %p118
      %p120 = scmp.ne.s32.totalorder %s109, %s110
      %p121 = scmp.eq.s32.totalorder %s31, 0
      %p122 = por %p120, %p121
      %p123 = scmp.ne.s32.totalorder %s109, %s110
      %p124 = scmp.eq.s32.totalorder %s32, 1
      %p125 = por %p123, %p124
      %p127 = scmp.ne.s32.totalorder %s110, %s126
      %p128 = scmp.eq.s32.totalorder %s32, 0
      %p129 = por %p127, %p128
      %s130 = ssub.s32 %s33, %s45
      %s131 = ssub.s32 %s34, %s41
      %s132 = sor.u32 %s130, %s131
      %p133 = scmp.eq.s32.totalorder %s132, 0
      %s135 = sadd.s32 %s134, 1
      %s136 = scalar_select %p133, %s134, %s135
      %p139 = pneg %p133
      %p140 = scmp.eq.s32.totalorder %s26, 1
      %p141 = por %p139, %p140
      %p142 = scmp.ne.s32.totalorder %s134, %s137
      %p143 = scmp.eq.s32.totalorder %s26, 0
      %p144 = por %p142, %p143
      %p145 = scmp.ne.s32.totalorder %s134, %s137
      %p146 = scmp.eq.s32.totalorder %s31, 1
      %p147 = por %p145, %p146
      %p148 = scmp.ne.s32.totalorder %s137, %s138
      %p149 = scmp.eq.s32.totalorder %s31, 0
      %p150 = por %p148, %p149
      %p151 = scmp.ne.s32.totalorder %s137, %s138
      %p152 = scmp.eq.s32.totalorder %s32, 1
      %p153 = por %p151, %p152
      %p155 = scmp.ne.s32.totalorder %s138, %s154
      %p156 = scmp.eq.s32.totalorder %s32, 0
      %p157 = por %p155, %p156
      %s159 = sadd.s32 %s158, 1
      %p162 = scmp.eq.s32.totalorder %s26, 1
      %p163 = scmp.ne.s32.totalorder %s158, %s160
      %p164 = scmp.eq.s32.totalorder %s26, 0
      %p165 = por %p163, %p164
      %p166 = scmp.ne.s32.totalorder %s158, %s160
      %p167 = scmp.eq.s32.totalorder %s31, 1
      %p168 = por %p166, %p167
      %p169 = scmp.ne.s32.totalorder %s160, %s161
      %p170 = scmp.eq.s32.totalorder %s31, 0
      %p171 = por %p169, %p170
      %p172 = scmp.ne.s32.totalorder %s160, %s161
      %p173 = scmp.eq.s32.totalorder %s32, 1
      %p174 = por %p172, %p173
      %p176 = scmp.ne.s32.totalorder %s161, %s175
      %p177 = scmp.eq.s32.totalorder %s32, 0
      %p178 = por %p176, %p177
      %s180 = sadd.s32 %s179, 1
      %p183 = scmp.eq.s32.totalorder %s26, 1
      %p184 = scmp.ne.s32.totalorder %s179, %s181
      %p185 = scmp.eq.s32.totalorder %s26, 0
      %p186 = por %p184, %p185
      %p187 = scmp.ne.s32.totalorder %s179, %s181
      %p188 = scmp.eq.s32.totalorder %s31, 1
      %p189 = por %p187, %p188
      %p190 = scmp.ne.s32.totalorder %s181, %s182
      %p191 = scmp.eq.s32.totalorder %s31, 0
      %p192 = por %p190, %p191
      %p193 = scmp.ne.s32.totalorder %s181, %s182
      %p194 = scmp.eq.s32.totalorder %s32, 1
      %p195 = por %p193, %p194
      %p197 = scmp.ne.s32.totalorder %s182, %s196
      %p198 = scmp.eq.s32.totalorder %s32, 0
      %p199 = por %p197, %p198
      %s201 = sadd.s32 %s200, 1
      %p204 = scmp.eq.s32.totalorder %s26, 1
      %p205 = scmp.ne.s32.totalorder %s200, %s202
      %p206 = scmp.eq.s32.totalorder %s26, 0
      %p207 = por %p205, %p206
      %p208 = scmp.ne.s32.totalorder %s200, %s202
      %p209 = scmp.eq.s32.totalorder %s31, 1
      %p210 = por %p208, %p209
      %p211 = scmp.ne.s32.totalorder %s202, %s203
      %p212 = scmp.eq.s32.totalorder %s31, 0
      %p213 = por %p211, %p212
      %p214 = scmp.ne.s32.totalorder %s202, %s203
      %p215 = scmp.eq.s32.totalorder %s32, 1
      %p216 = por %p214, %p215
      %p218 = scmp.ne.s32.totalorder %s203, %s217
      %p219 = scmp.eq.s32.totalorder %s32, 0
      %p220 = por %p218, %p219
      %s222 = sadd.s32 %s221, 1
      %p225 = scmp.eq.s32.totalorder %s26, 1
      %p226 = scmp.ne.s32.totalorder %s221, %s223
      %p227 = scmp.eq.s32.totalorder %s26, 0
      %p228 = por %p226, %p227
      %p229 = scmp.ne.s32.totalorder %s221, %s223
      %p230 = scmp.eq.s32.totalorder %s31, 1
      %p231 = por %p229, %p230
      %p232 = scmp.ne.s32.totalorder %s223, %s224
      %p233 = scmp.eq.s32.totalorder %s31, 0
      %p234 = por %p232, %p233
      %p235 = scmp.ne.s32.totalorder %s223, %s224
      %p236 = scmp.eq.s32.totalorder %s32, 1
      %p237 = por %p235, %p236
      %p239 = scmp.ne.s32.totalorder %s224, %s238
      %p240 = scmp.eq.s32.totalorder %s32, 0
      %p241 = por %p239, %p240
      %s243 = sadd.s32 %s242, 1
      %p246 = scmp.eq.s32.totalorder %s26, 1
      %p247 = scmp.ne.s32.totalorder %s242, %s244
      %p248 = scmp.eq.s32.totalorder %s26, 0
      %p249 = por %p247, %p248
      %p250 = scmp.ne.s32.totalorder %s242, %s244
      %p251 = scmp.eq.s32.totalorder %s31, 1
      %p252 = por %p250, %p251
      %p253 = scmp.ne.s32.totalorder %s244, %s245
      %p254 = scmp.eq.s32.totalorder %s31, 0
      %p255 = por %p253, %p254
      %p256 = scmp.ne.s32.totalorder %s244, %s245
      %p257 = scmp.eq.s32.totalorder %s32, 1
      %p258 = por %p256, %p257
      %p260 = scmp.ne.s32.totalorder %s245, %s259
      %p261 = scmp.eq.s32.totalorder %s32, 0
      %p262 = por %p260, %p261
      %s264 = sadd.s32 %s263, 1
      %p267 = scmp.eq.s32.totalorder %s26, 1
      %p268 = scmp.ne.s32.totalorder %s263, %s265
      %p269 = scmp.eq.s32.totalorder %s26, 0
      %p270 = por %p268, %p269
      %p271 = scmp.ne.s32.totalorder %s263, %s265
      %p272 = scmp.eq.s32.totalorder %s31, 1
      %p273 = por %p271, %p272
      %p274 = scmp.ne.s32.totalorder %s265, %s266
      %p275 = scmp.eq.s32.totalorder %s31, 0
      %p276 = por %p274, %p275
      %p277 = scmp.ne.s32.totalorder %s265, %s266
      %p278 = scmp.eq.s32.totalorder %s32, 1
      %p279 = por %p277, %p278
      %p281 = scmp.ne.s32.totalorder %s266, %s280
      %p282 = scmp.eq.s32.totalorder %s32, 0
      %p283 = por %p281, %p282
      %s284 = ssub.s32 %s33, %s45
      %s285 = ssub.s32 %s34, %s41
      %s286 = sor.u32 %s284, %s285
      %p287 = scmp.eq.s32.totalorder %s286, 0
      %s289 = sadd.s32 %s288, 1
      %s290 = scalar_select %p287, %s288, %s289
      %p293 = pneg %p287
      %p294 = scmp.eq.s32.totalorder %s26, 1
      %p295 = por %p293, %p294
      %p296 = scmp.ne.s32.totalorder %s288, %s291
      %p297 = scmp.eq.s32.totalorder %s26, 0
      %p298 = por %p296, %p297
      %p299 = scmp.ne.s32.totalorder %s288, %s291
      %p300 = scmp.eq.s32.totalorder %s31, 1
      %p301 = por %p299, %p300
      %p302 = scmp.ne.s32.totalorder %s291, %s292
      %p303 = scmp.eq.s32.totalorder %s31, 0
      %p304 = por %p302, %p303
      %p305 = scmp.ne.s32.totalorder %s291, %s292
      %p306 = scmp.eq.s32.totalorder %s32, 1
      %p307 = por %p305, %p306
      %p309 = scmp.ne.s32.totalorder %s292, %s308
      %p310 = scmp.eq.s32.totalorder %s32, 0
      %p311 = por %p309, %p310
      %p312 = scmp.le.s32.totalorder 1, %s26
      %p313 = scmp.lt.s32.totalorder %s26, 3
      %p314 = pnand %p312, %p313
      %p315 = pneg %p314
      // Predicated region
      $region9: #{tpu_custom_call.1} parent=5 // pred_check
        _
      $region10: #{tpu_custom_call.1} parent=5 // pred_check_branch
        %317 = sbr.rel (%p314) target = $region12
      $region11: #{tpu_custom_call.1} parent=5 // pred_region
        %s318 = ssub.s32 %s26, 1
        // Predicated region
        $region13: #{tpu_custom_call.1} parent=11 // pred_check
          %p319 = pneg %p171
        $region14: #{tpu_custom_call.1} parent=11 // pred_check_branch
          %321 = sbr.rel (%p319) target = $region16
        $region15: #{tpu_custom_call.1} parent=11 // pred_region
          _
        $region16: #{tpu_custom_call.1} parent=11 // pred_fallthru
          _
        // Predicated region
        $region17: #{tpu_custom_call.1} parent=11 // pred_check
          %p322 = pneg %p192
        $region18: #{tpu_custom_call.1} parent=11 // pred_check_branch
          %324 = sbr.rel (%p322) target = $region20
        $region19: #{tpu_custom_call.1} parent=11 // pred_region
          %326 = vsyncadd [#allocation8], 0
          %s328 = sshll.u32 %s5, 4
          %s329 = int_to_ptr.hbm [resolvable:$true] %s328
          %s330 = sshll.u32 [#allocation9], 4
          %s331 = int_to_ptr.vmem [resolvable:$true] %s330
          %333 = dma.hbm_to_vmem [thread:$0]  %s329, 128, %s331, [#allocation8]
        $region20: #{tpu_custom_call.1} parent=11 // pred_fallthru
          _
        // Predicated region
        $region21: #{tpu_custom_call.1} parent=11 // pred_check
          %p334 = pneg %p213
        $region22: #{tpu_custom_call.1} parent=11 // pred_check_branch
          %336 = sbr.rel (%p334) target = $region24
        $region23: #{tpu_custom_call.1} parent=11 // pred_region
          %338 = vsyncadd [#allocation11], 0
          %s340 = sshll.u32 %s6, 4
          %s341 = int_to_ptr.hbm [resolvable:$true] %s340
          %s342 = sshll.u32 [#allocation10], 4
          %s343 = int_to_ptr.vmem [resolvable:$true] %s342
          %345 = dma.hbm_to_vmem [thread:$0]  %s341, 128, %s343, [#allocation11]
        $region24: #{tpu_custom_call.1} parent=11 // pred_fallthru
          _
        // Predicated region
        $region25: #{tpu_custom_call.1} parent=11 // pred_check
          %p346 = pneg %p234
        $region26: #{tpu_custom_call.1} parent=11 // pred_check_branch
          %348 = sbr.rel (%p346) target = $region28
        $region27: #{tpu_custom_call.1} parent=11 // pred_region
          %350 = vsyncadd [#allocation11], 0
          %s352 = sshll.u32 %s7, 4
          %s353 = int_to_ptr.hbm [resolvable:$true] %s352
          %s354 = sshll.u32 [#allocation12], 4
          %s355 = int_to_ptr.vmem [resolvable:$true] %s354
          %357 = dma.hbm_to_vmem [thread:$0]  %s353, 128, %s355, [#allocation11]
        $region28: #{tpu_custom_call.1} parent=11 // pred_fallthru
          _
        // Predicated region
        $region29: #{tpu_custom_call.1} parent=11 // pred_check
          %p358 = pneg %p255
        $region30: #{tpu_custom_call.1} parent=11 // pred_check_branch
          %360 = sbr.rel (%p358) target = $region32
        $region31: #{tpu_custom_call.1} parent=11 // pred_region
          _
        $region32: #{tpu_custom_call.1} parent=11 // pred_fallthru
          _
        // Predicated region
        $region33: #{tpu_custom_call.1} parent=11 // pred_check
          %p361 = pneg %p276
        $region34: #{tpu_custom_call.1} parent=11 // pred_check_branch
          %363 = sbr.rel (%p361) target = $region36
        $region35: #{tpu_custom_call.1} parent=11 // pred_region
          _
        $region36: #{tpu_custom_call.1} parent=11 // pred_fallthru
          _
      $region12: #{tpu_custom_call.1} parent=5 // pred_fallthru
        _
      %p364 = scmp.lt.s32.totalorder %s26, 2
      // Predicated region
      $region37: #{tpu_custom_call.1} parent=5 // pred_check
        %p365 = pneg %p364
      $region38: #{tpu_custom_call.1} parent=5 // pred_check_branch
        %367 = sbr.rel (%p365) target = $region40
      $region39: #{tpu_custom_call.1} parent=5 // pred_region
        // Predicated region
        $region41: #{tpu_custom_call.1} parent=39 // pred_check
          %p368 = pneg %p60
        $region42: #{tpu_custom_call.1} parent=39 // pred_check_branch
          %370 = sbr.rel (%p368) target = $region44
        $region43: #{tpu_custom_call.1} parent=39 // pred_region
          %s371 = sand.u32 %s50, 1
          %s372 = scalar_lea.sflag [#allocation3], %s371
          %s373 = sand.u32 %s50, 1
          %s374 = smul.addr %s373, 16
          %s375 = scalar_lea.vmem [#allocation2], %s374
          %s376 = smul.u32 2, %s34
          %378 = vsyncadd %s372, 0
          %s379 = smul.addr %s33, 2
          %s380 = sadd.s32 %s376, %s379
          %s381 = smul.addr %s380, 8
          %s382 = scalar_lea.hbm %s0, %s381
          %s384 = sshll.u32 %s382, 4
          %s385 = int_to_ptr.hbm [resolvable:$true] %s384
          %s386 = sshll.u32 %s375, 4
          %s387 = int_to_ptr.vmem [resolvable:$true] %s386
          %389 = dma.hbm_to_vmem [thread:$0]  %s385, 256, %s387, %s372
        $region44: #{tpu_custom_call.1} parent=39 // pred_fallthru
          _
        // Predicated region
        $region45: #{tpu_custom_call.1} parent=39 // pred_check
          %p390 = pneg %p88
        $region46: #{tpu_custom_call.1} parent=39 // pred_check_branch
          %392 = sbr.rel (%p390) target = $region48
        $region47: #{tpu_custom_call.1} parent=39 // pred_region
          %s393 = sand.u32 %s26, 1
          %s394 = scalar_lea.sflag [#allocation5], %s393
          %s395 = sand.u32 %s78, 1
          %s396 = smul.addr %s395, 16
          %s397 = scalar_lea.vmem [#allocation4], %s396
          %s398 = smul.u32 2, %s34
          %400 = vsyncadd %s394, 0
          %s401 = smul.addr %s33, 2
          %s402 = sadd.s32 %s398, %s401
          %s403 = smul.addr %s402, 8
          %s404 = scalar_lea.hbm %s1, %s403
          %s406 = sshll.u32 %s404, 4
          %s407 = int_to_ptr.hbm [resolvable:$true] %s406
          %s408 = sshll.u32 %s397, 4
          %s409 = int_to_ptr.vmem [resolvable:$true] %s408
          %411 = dma.hbm_to_vmem [thread:$0]  %s407, 256, %s409, %s394
        $region48: #{tpu_custom_call.1} parent=39 // pred_fallthru
          _
        // Predicated region
        $region49: #{tpu_custom_call.1} parent=39 // pred_check
          %p412 = pneg %p116
        $region50: #{tpu_custom_call.1} parent=39 // pred_check_branch
          %414 = sbr.rel (%p412) target = $region52
        $region51: #{tpu_custom_call.1} parent=39 // pred_region
          %s415 = sand.u32 %s26, 1
          %s416 = scalar_lea.sflag [#allocation5], %s415
          %s417 = sand.u32 %s106, 1
          %s418 = smul.addr %s417, 16
          %s419 = scalar_lea.vmem [#allocation6], %s418
          %s420 = smul.u32 2, %s34
          %422 = vsyncadd %s416, 0
          %s423 = smul.addr %s33, 2
          %s424 = sadd.s32 %s420, %s423
          %s425 = smul.addr %s424, 8
          %s426 = scalar_lea.hbm %s2, %s425
          %s428 = sshll.u32 %s426, 4
          %s429 = int_to_ptr.hbm [resolvable:$true] %s428
          %s430 = sshll.u32 %s419, 4
          %s431 = int_to_ptr.vmem [resolvable:$true] %s430
          %433 = dma.hbm_to_vmem [thread:$0]  %s429, 256, %s431, %s416
        $region52: #{tpu_custom_call.1} parent=39 // pred_fallthru
          _
        // Predicated region
        $region53: #{tpu_custom_call.1} parent=39 // pred_check
          %p434 = pneg %p144
        $region54: #{tpu_custom_call.1} parent=39 // pred_check_branch
          %436 = sbr.rel (%p434) target = $region56
        $region55: #{tpu_custom_call.1} parent=39 // pred_region
          %s437 = sand.u32 %s26, 1
          %s438 = scalar_lea.sflag [#allocation8], %s437
          %s439 = sand.u32 %s134, 1
          %s440 = smul.addr %s439, 16
          %s441 = scalar_lea.vmem [#allocation7], %s440
          %s442 = smul.u32 2, %s34
          %444 = vsyncadd %s438, 0
          %s445 = smul.addr %s33, 2
          %s446 = sadd.s32 %s442, %s445
          %s447 = smul.addr %s446, 8
          %s448 = scalar_lea.hbm %s3, %s447
          %s450 = sshll.u32 %s448, 4
          %s451 = int_to_ptr.hbm [resolvable:$true] %s450
          %s452 = sshll.u32 %s441, 4
          %s453 = int_to_ptr.vmem [resolvable:$true] %s452
          %455 = dma.hbm_to_vmem [thread:$0]  %s451, 256, %s453, %s438
        $region56: #{tpu_custom_call.1} parent=39 // pred_fallthru
          _
      $region40: #{tpu_custom_call.1} parent=5 // pred_fallthru
        _
      %p456 = scmp.le.s32.totalorder 1, %s26
      %p457 = scmp.lt.s32.totalorder %s26, 3
      %p458 = pnand %p456, %p457
      %p459 = pneg %p458
      // Predicated region
      $region57: #{tpu_custom_call.1} parent=5 // pred_check
        _
      $region58: #{tpu_custom_call.1} parent=5 // pred_check_branch
        %461 = sbr.rel (%p458) target = $region60
      $region59: #{tpu_custom_call.1} parent=5 // pred_region
        %s462 = ssub.s32 %s26, 1
        %s463 = sand.u32 %s53, 1
        %s464 = scalar_lea.sflag [#allocation3], %s463
        %s465 = sand.u32 %s53, 1
        %s466 = smul.addr %s465, 16
        %s467 = scalar_lea.vmem [#allocation2], %s466
        // Predicated region
        $region61: #{tpu_custom_call.1} parent=59 // pred_check
          %p468 = pneg %p66
        $region62: #{tpu_custom_call.1} parent=59 // pred_check_branch
          %470 = sbr.rel (%p468) target = $region64
        $region63: #{tpu_custom_call.1} parent=59 // pred_region
          %472 = dma.done %s464, 256
        $region64: #{tpu_custom_call.1} parent=59 // pred_fallthru
          _
        %s473 = sand.u32 %s31, 1
        %s474 = scalar_lea.sflag [#allocation5], %s473
        %s475 = sand.u32 %s81, 1
        %s476 = smul.addr %s475, 16
        %s477 = scalar_lea.vmem [#allocation4], %s476
        // Predicated region
        $region65: #{tpu_custom_call.1} parent=59 // pred_check
          %p478 = pneg %p94
        $region66: #{tpu_custom_call.1} parent=59 // pred_check_branch
          %480 = sbr.rel (%p478) target = $region68
        $region67: #{tpu_custom_call.1} parent=59 // pred_region
          %482 = dma.done %s474, 256
        $region68: #{tpu_custom_call.1} parent=59 // pred_fallthru
          _
        %s483 = sand.u32 %s31, 1
        %s484 = scalar_lea.sflag [#allocation5], %s483
        %s485 = sand.u32 %s109, 1
        %s486 = smul.addr %s485, 16
        %s487 = scalar_lea.vmem [#allocation6], %s486
        // Predicated region
        $region69: #{tpu_custom_call.1} parent=59 // pred_check
          %p488 = pneg %p122
        $region70: #{tpu_custom_call.1} parent=59 // pred_check_branch
          %490 = sbr.rel (%p488) target = $region72
        $region71: #{tpu_custom_call.1} parent=59 // pred_region
          %492 = dma.done %s484, 256
        $region72: #{tpu_custom_call.1} parent=59 // pred_fallthru
          _
        %s493 = sand.u32 %s31, 1
        %s494 = scalar_lea.sflag [#allocation8], %s493
        %s495 = sand.u32 %s137, 1
        %s496 = smul.addr %s495, 16
        %s497 = scalar_lea.vmem [#allocation7], %s496
        // Predicated region
        $region73: #{tpu_custom_call.1} parent=59 // pred_check
          %p498 = pneg %p150
        $region74: #{tpu_custom_call.1} parent=59 // pred_check_branch
          %500 = sbr.rel (%p498) target = $region76
        $region75: #{tpu_custom_call.1} parent=59 // pred_region
          %502 = dma.done %s494, 256
        $region76: #{tpu_custom_call.1} parent=59 // pred_fallthru
          _
        // Predicated region
        $region77: #{tpu_custom_call.1} parent=59 // pred_check
          %p503 = pneg %p192
        $region78: #{tpu_custom_call.1} parent=59 // pred_check_branch
          %505 = sbr.rel (%p503) target = $region80
        $region79: #{tpu_custom_call.1} parent=59 // pred_region
          %507 = dma.done [#allocation8], 128
        $region80: #{tpu_custom_call.1} parent=59 // pred_fallthru
          _
        // Predicated region
        $region81: #{tpu_custom_call.1} parent=59 // pred_check
          %p508 = pneg %p213
        $region82: #{tpu_custom_call.1} parent=59 // pred_check_branch
          %510 = sbr.rel (%p508) target = $region84
        $region83: #{tpu_custom_call.1} parent=59 // pred_region
          %512 = dma.done [#allocation11], 128
        $region84: #{tpu_custom_call.1} parent=59 // pred_fallthru
          _
        // Predicated region
        $region85: #{tpu_custom_call.1} parent=59 // pred_check
          %p513 = pneg %p234
        $region86: #{tpu_custom_call.1} parent=59 // pred_check_branch
          %515 = sbr.rel (%p513) target = $region88
        $region87: #{tpu_custom_call.1} parent=59 // pred_region
          %517 = dma.done [#allocation11], 128
        $region88: #{tpu_custom_call.1} parent=59 // pred_fallthru
          _
        %s518 = sand.u32 %s53, 1
        %s519 = scalar_lea.sflag [#allocation3], %s518
        %s520 = sand.u32 %s53, 1
        %s521 = smul.addr %s520, 16
        %s522 = scalar_lea.vmem [#allocation2], %s521
        %p523 = pneg %p66
        %p524 = pneg %p63
        %s525 = sand.u32 %s31, 1
        %s526 = scalar_lea.sflag [#allocation5], %s525
        %s527 = sand.u32 %s81, 1
        %s528 = smul.addr %s527, 16
        %s529 = scalar_lea.vmem [#allocation4], %s528
        %p530 = pneg %p94
        %p531 = pneg %p91
        %s532 = sand.u32 %s31, 1
        %s533 = scalar_lea.sflag [#allocation5], %s532
        %s534 = sand.u32 %s109, 1
        %s535 = smul.addr %s534, 16
        %s536 = scalar_lea.vmem [#allocation6], %s535
        %p537 = pneg %p122
        %p538 = pneg %p119
        %s539 = sand.u32 %s31, 1
        %s540 = scalar_lea.sflag [#allocation8], %s539
        %s541 = sand.u32 %s137, 1
        %s542 = smul.addr %s541, 16
        %s543 = scalar_lea.vmem [#allocation7], %s542
        %p544 = pneg %p150
        %p545 = pneg %p147
        %p546 = pneg %p171
        %p547 = pneg %p168
        %p548 = pneg %p192
        %p549 = pneg %p189
        %p550 = pneg %p213
        %p551 = pneg %p210
        %p552 = pneg %p234
        %p553 = pneg %p231
        %p554 = pneg %p255
        %p555 = pneg %p252
        %p556 = pneg %p276
        %p557 = pneg %p273
        %p558 = pneg %p304
        %p559 = pneg %p301
        %s560 = smul.u32 2, %s36
        %p561 = scmp.lt.s32.totalorder %s35, 1
        %s562 = scalar_select %p561, %s35, 1
        %p563 = scmp.lt.s32.totalorder %s560, 1
        %s564 = scalar_select %p563, %s560, 1
        %s565 = smul.addr %s562, 2
        %s566 = sadd.s32 %s564, %s565
        %s567 = smul.addr %s566, 8
        %s568 = scalar_lea.vmem %s10, %s567
        %s569 = smul.u32 2, %s36
        %s570 = smul.u32 2, %s36
        %s571 = smul.u32 2, %s36
        %s572 = smul.u32 2, %s36
        %s573 = smul.u32 2, %s36
        %p574 = scmp.lt.s32.totalorder %s35, 1
        %s575 = scalar_select %p574, %s35, 1
        %p576 = scmp.lt.s32.totalorder %s573, 1
        %s577 = scalar_select %p576, %s573, 1
        %s578 = smul.addr %s575, 2
        %s579 = sadd.s32 %s577, %s578
        %s580 = smul.addr %s579, 8
        %s581 = scalar_lea.vmem %s10, %s580
        %s582 = smul.u32 2, %s36
        %v583 = vld [vmem:[%s4] sm:$0xff]
        %v584 = vld [vmem:[%s467] sm:$0xff]
        %v585 = vld [vmem:[%s467 + $0x8] sm:$0xff]
        %v586 = vld [vmem:[#allocation9] sm:$0xff]
        %v587 = vld [vmem:[%s477] sm:$0xff]
        %v588 = vld [vmem:[%s477 + $0x8] sm:$0xff]
        %vm589 = vcmask 64512
        %v591 = vsel %vm589, %v586, 0
        %593 = vmatpush.msra.mxu0 0.0
        %594 = vmatpush.msra.mxu0 0.0
        %595 = vmatpush.msra.mxu0 0.0
        %596 = vmatpush.msra.mxu0 0.0
        %597 = vmatpush.msra.mxu0 0.0
        %598 = vmatpush.msra.mxu0 0.0
        %599 = vmatpush.msra.mxu0 0.0
        %600 = vmatpush.msra.mxu0 0.0
        %601 = vmatpush.msra.mxu0 0.0
        %602 = vmatpush.msra.mxu0 0.0
        %603 = vmatpush.msra.mxu0 0.0
        %604 = vmatpush.msra.mxu0 0.0
        %605 = vmatpush.msra.mxu0 0.0
        %606 = vmatpush.msra.mxu0 0.0
        %607 = vmatpush.msra.mxu0 0.0
        %608 = vmatpush.msra.mxu0 %v587
        %609 = vmatmul.f32.gmra.mxu0 %v591
        %v610 = vpop.f32.mrf.mxu0
        %v611 = vadd.f32 0.0, %v610
        %612 = vdwg.mxu0
        %613 = vmatpush.msra.mxu0 0.0
        %614 = vmatpush.msra.mxu0 0.0
        %615 = vmatpush.msra.mxu0 0.0
        %616 = vmatpush.msra.mxu0 0.0
        %617 = vmatpush.msra.mxu0 0.0
        %618 = vmatpush.msra.mxu0 0.0
        %619 = vmatpush.msra.mxu0 0.0
        %620 = vmatpush.msra.mxu0 0.0
        %621 = vmatpush.msra.mxu0 0.0
        %622 = vmatpush.msra.mxu0 0.0
        %623 = vmatpush.msra.mxu0 0.0
        %624 = vmatpush.msra.mxu0 0.0
        %625 = vmatpush.msra.mxu0 0.0
        %626 = vmatpush.msra.mxu0 0.0
        %627 = vmatpush.msra.mxu0 0.0
        %628 = vmatpush.msra.mxu0 %v588
        %629 = vmatmul.f32.gmra.mxu0 %v591
        %v630 = vpop.f32.mrf.mxu0
        %v631 = vadd.f32 0.0, %v630
        %632 = vdwg.mxu0
        %v634 = vsel %vm589, %v583, 0
        %636 = vmatpush.msra.mxu0 0.0
        %637 = vmatpush.msra.mxu0 0.0
        %638 = vmatpush.msra.mxu0 0.0
        %639 = vmatpush.msra.mxu0 0.0
        %640 = vmatpush.msra.mxu0 0.0
        %641 = vmatpush.msra.mxu0 0.0
        %642 = vmatpush.msra.mxu0 0.0
        %643 = vmatpush.msra.mxu0 0.0
        %644 = vmatpush.msra.mxu0 0.0
        %645 = vmatpush.msra.mxu0 0.0
        %646 = vmatpush.msra.mxu0 0.0
        %647 = vmatpush.msra.mxu0 0.0
        %648 = vmatpush.msra.mxu0 0.0
        %649 = vmatpush.msra.mxu0 0.0
        %650 = vmatpush.msra.mxu0 0.0
        %651 = vmatpush.msra.mxu0 %v584
        %652 = vmatmul.f32.gmra.mxu0 %v634
        %v653 = vpop.f32.mrf.mxu0
        %v654 = vadd.f32 %v611, %v653
        %655 = vdwg.mxu0
        %656 = vmatpush.msra.mxu0 0.0
        %657 = vmatpush.msra.mxu0 0.0
        %658 = vmatpush.msra.mxu0 0.0
        %659 = vmatpush.msra.mxu0 0.0
        %660 = vmatpush.msra.mxu0 0.0
        %661 = vmatpush.msra.mxu0 0.0
        %662 = vmatpush.msra.mxu0 0.0
        %663 = vmatpush.msra.mxu0 0.0
        %664 = vmatpush.msra.mxu0 0.0
        %665 = vmatpush.msra.mxu0 0.0
        %666 = vmatpush.msra.mxu0 0.0
        %667 = vmatpush.msra.mxu0 0.0
        %668 = vmatpush.msra.mxu0 0.0
        %669 = vmatpush.msra.mxu0 0.0
        %670 = vmatpush.msra.mxu0 0.0
        %671 = vmatpush.msra.mxu0 %v585
        %672 = vmatmul.f32.gmra.mxu0 %v634
        %v673 = vpop.f32.mrf.mxu0
        %v674 = vadd.f32 %v631, %v673
        %675 = vdwg.mxu0
        %v676 = vld [vmem:[#allocation10] sm:$0xff]
        %v677 = vld [vmem:[%s487] sm:$0xff]
        %v678 = vld [vmem:[%s487 + $0x8] sm:$0xff]
        %v680 = vsel %vm589, %v676, 0
        %682 = vmatpush.msra.mxu0 0.0
        %683 = vmatpush.msra.mxu0 0.0
        %684 = vmatpush.msra.mxu0 0.0
        %685 = vmatpush.msra.mxu0 0.0
        %686 = vmatpush.msra.mxu0 0.0
        %687 = vmatpush.msra.mxu0 0.0
        %688 = vmatpush.msra.mxu0 0.0
        %689 = vmatpush.msra.mxu0 0.0
        %690 = vmatpush.msra.mxu0 0.0
        %691 = vmatpush.msra.mxu0 0.0
        %692 = vmatpush.msra.mxu0 0.0
        %693 = vmatpush.msra.mxu0 0.0
        %694 = vmatpush.msra.mxu0 0.0
        %695 = vmatpush.msra.mxu0 0.0
        %696 = vmatpush.msra.mxu0 0.0
        %697 = vmatpush.msra.mxu0 %v677
        %698 = vmatmul.f32.gmra.mxu0 %v680
        %v699 = vpop.f32.mrf.mxu0
        %v700 = vadd.f32 0.0, %v699
        %701 = vdwg.mxu0
        %702 = vmatpush.msra.mxu0 0.0
        %703 = vmatpush.msra.mxu0 0.0
        %704 = vmatpush.msra.mxu0 0.0
        %705 = vmatpush.msra.mxu0 0.0
        %706 = vmatpush.msra.mxu0 0.0
        %707 = vmatpush.msra.mxu0 0.0
        %708 = vmatpush.msra.mxu0 0.0
        %709 = vmatpush.msra.mxu0 0.0
        %710 = vmatpush.msra.mxu0 0.0
        %711 = vmatpush.msra.mxu0 0.0
        %712 = vmatpush.msra.mxu0 0.0
        %713 = vmatpush.msra.mxu0 0.0
        %714 = vmatpush.msra.mxu0 0.0
        %715 = vmatpush.msra.mxu0 0.0
        %716 = vmatpush.msra.mxu0 0.0
        %717 = vmatpush.msra.mxu0 %v678
        %718 = vmatmul.f32.gmra.mxu0 %v680
        %v719 = vpop.f32.mrf.mxu0
        %v720 = vadd.f32 0.0, %v719
        %721 = vdwg.mxu0
        %v722 = vadd.f32 %v654, %v700
        %v723 = vadd.f32 %v674, %v720
        %v724 = vld [vmem:[#allocation12] sm:$0xff]
        %v725 = vld [vmem:[%s497] sm:$0xff]
        %v726 = vld [vmem:[%s497 + $0x8] sm:$0xff]
        %v728 = vsel %vm589, %v724, 0
        %730 = vmatpush.msra.mxu0 0.0
        %731 = vmatpush.msra.mxu0 0.0
        %732 = vmatpush.msra.mxu0 0.0
        %733 = vmatpush.msra.mxu0 0.0
        %734 = vmatpush.msra.mxu0 0.0
        %735 = vmatpush.msra.mxu0 0.0
        %736 = vmatpush.msra.mxu0 0.0
        %737 = vmatpush.msra.mxu0 0.0
        %738 = vmatpush.msra.mxu0 0.0
        %739 = vmatpush.msra.mxu0 0.0
        %740 = vmatpush.msra.mxu0 0.0
        %741 = vmatpush.msra.mxu0 0.0
        %742 = vmatpush.msra.mxu0 0.0
        %743 = vmatpush.msra.mxu0 0.0
        %744 = vmatpush.msra.mxu0 0.0
        %745 = vmatpush.msra.mxu0 %v725
        %746 = vmatmul.f32.gmra.mxu0 %v728
        %v747 = vpop.f32.mrf.mxu0
        %v748 = vadd.f32 0.0, %v747
        %749 = vdwg.mxu0
        %750 = vmatpush.msra.mxu0 0.0
        %751 = vmatpush.msra.mxu0 0.0
        %752 = vmatpush.msra.mxu0 0.0
        %753 = vmatpush.msra.mxu0 0.0
        %754 = vmatpush.msra.mxu0 0.0
        %755 = vmatpush.msra.mxu0 0.0
        %756 = vmatpush.msra.mxu0 0.0
        %757 = vmatpush.msra.mxu0 0.0
        %758 = vmatpush.msra.mxu0 0.0
        %759 = vmatpush.msra.mxu0 0.0
        %760 = vmatpush.msra.mxu0 0.0
        %761 = vmatpush.msra.mxu0 0.0
        %762 = vmatpush.msra.mxu0 0.0
        %763 = vmatpush.msra.mxu0 0.0
        %764 = vmatpush.msra.mxu0 0.0
        %765 = vmatpush.msra.mxu0 %v726
        %766 = vmatmul.f32.gmra.mxu0 %v728
        %v767 = vpop.f32.mrf.mxu0
        %v768 = vadd.f32 0.0, %v767
        %769 = vdwg.mxu0
        %v770 = vadd.f32 %v722, %v748
        %v771 = vadd.f32 %v723, %v768
        %v772 = vmax.f32 %v770, 0.0
        %v773 = vmax.f32 %v771, 0.0
        %v774 = vld [vmem:[%s8] sm:$0x1f]
        %v775 = vld [vmem:[%s9] sm:$0x1f]
        %777 = vset.pattern.permute.xlu0 0
        %778 = vperm.xlu0 %777, %v775
        %v779 = vpop.permute.xlu0 %778
        %v782 = vsel %vm589, %v774, 0
        %784 = vmatpush.msra.mxu0 0.0
        %785 = vmatpush.msra.mxu0 0.0
        %786 = vmatpush.msra.mxu0 0.0
        %787 = vmatpush.msra.mxu0 0.0
        %788 = vmatpush.msra.mxu0 0.0
        %789 = vmatpush.msra.mxu0 0.0
        %790 = vmatpush.msra.mxu0 0.0
        %791 = vmatpush.msra.mxu0 0.0
        %792 = vmatpush.msra.mxu0 0.0
        %793 = vmatpush.msra.mxu0 0.0
        %794 = vmatpush.msra.mxu0 0.0
        %795 = vmatpush.msra.mxu0 0.0
        %796 = vmatpush.msra.mxu0 0.0
        %797 = vmatpush.msra.mxu0 0.0
        %798 = vmatpush.msra.mxu0 0.0
        %799 = vmatpush.msra.mxu0 %v772
        %800 = vmatmul.f32.gmra.mxu0 %v782
        %v801 = vpop.f32.mrf.mxu0
        %v802 = vadd.f32 %v779, %v801
        %803 = vdwg.mxu0
        %804 = vmatpush.msra.mxu0 0.0
        %805 = vmatpush.msra.mxu0 0.0
        %806 = vmatpush.msra.mxu0 0.0
        %807 = vmatpush.msra.mxu0 0.0
        %808 = vmatpush.msra.mxu0 0.0
        %809 = vmatpush.msra.mxu0 0.0
        %810 = vmatpush.msra.mxu0 0.0
        %811 = vmatpush.msra.mxu0 0.0
        %812 = vmatpush.msra.mxu0 0.0
        %813 = vmatpush.msra.mxu0 0.0
        %814 = vmatpush.msra.mxu0 0.0
        %815 = vmatpush.msra.mxu0 0.0
        %816 = vmatpush.msra.mxu0 0.0
        %817 = vmatpush.msra.mxu0 0.0
        %818 = vmatpush.msra.mxu0 0.0
        %819 = vmatpush.msra.mxu0 %v773
        %820 = vmatmul.f32.gmra.mxu0 %v782
        %v821 = vpop.f32.mrf.mxu0
        %v822 = vadd.f32 %v779, %v821
        %823 = vdwg.mxu0
        %824 = vst [vmem:[%s581] sm:$0x1f] %v802
        %825 = vst [vmem:[%s581 + $0x8] sm:$0x1f] %v822
        %s826 = smul.u32 2, %s36
        %p827 = scmp.lt.s32.totalorder %s35, 1
        %s828 = scalar_select %p827, %s35, 1
        %p829 = scmp.lt.s32.totalorder %s826, 1
        %s830 = scalar_select %p829, %s826, 1
        %s831 = smul.addr %s828, 2
        %s832 = sadd.s32 %s830, %s831
        %s833 = smul.addr %s832, 8
        %s834 = scalar_lea.vmem %s10, %s833
        // Predicated region
        $region89: #{tpu_custom_call.1} parent=59 // pred_check
          %p835 = pneg %p301
        $region90: #{tpu_custom_call.1} parent=59 // pred_check_branch
          %837 = sbr.rel (%p835) target = $region92
        $region91: #{tpu_custom_call.1} parent=59 // pred_region
          %s838 = smul.u32 2, %s36
        $region92: #{tpu_custom_call.1} parent=59 // pred_fallthru
          _
      $region60: #{tpu_custom_call.1} parent=5 // pred_fallthru
        _
      %p839 = scmp.le.s32.totalorder 2, %s26
      // Predicated region
      $region93: #{tpu_custom_call.1} parent=5 // pred_check
        %p840 = pneg %p839
      $region94: #{tpu_custom_call.1} parent=5 // pred_check_branch
        %842 = sbr.rel (%p840) target = $region96
      $region95: #{tpu_custom_call.1} parent=5 // pred_region
        %s843 = ssub.s32 %s26, 2
        // Predicated region
        $region97: #{tpu_custom_call.1} parent=95 // pred_check
          %p844 = pneg %p307
        $region98: #{tpu_custom_call.1} parent=95 // pred_check_branch
          %846 = sbr.rel (%p844) target = $region100
        $region99: #{tpu_custom_call.1} parent=95 // pred_region
          %s847 = smul.u32 2, %s38
          %p848 = scmp.lt.s32.totalorder %s37, 1
          %s849 = scalar_select %p848, %s37, 1
          %p850 = scmp.lt.s32.totalorder %s847, 1
          %s851 = scalar_select %p850, %s847, 1
          %s852 = smul.addr %s849, 2
          %s853 = sadd.s32 %s851, %s852
          %s854 = smul.addr %s853, 8
          %s855 = scalar_lea.vmem %s10, %s854
        $region100: #{tpu_custom_call.1} parent=95 // pred_fallthru
          _
      $region96: #{tpu_custom_call.1} parent=5 // pred_fallthru
        _
    $region6: #{tpu_custom_call.1} parent=1 // loop_footer
      %s30 = sadd.s32 1, %s26
    $region7: #{tpu_custom_call.1} parent=1 // loop_footer_branch
      %25 = sbr.rel target = $region3
    $region8: #{tpu_custom_call.1} parent=1 // loop_exit
      _
    %856 = vsyncpa [#allocation3], 1
    %s857 = scalar_lea.sflag [#allocation3], 1
    %858 = vsyncpa %s857, 1
    %859 = vsyncpa [#allocation5], 1
    %s860 = scalar_lea.sflag [#allocation5], 1
    %861 = vsyncpa %s860, 1
    %862 = vsyncpa [#allocation8], 1
    %s863 = scalar_lea.sflag [#allocation8], 1
    %864 = vsyncpa %s863, 1
    %865 = vsyncpa [#allocation11], 1

</llo_original>
